<compile_context>
chip_gen: v5e
topology: v5e:2x2
jax: 0.10.0
libtpu: 0.0.40
codegen_flags: <defaults>
</compile_context>

<pallas_src>
import jax
import jax.numpy as jnp
from jax.experimental import pallas as pl
from jax.experimental.pallas import tpu as pltpu


def _locked_dropout_kernel(mask_ref, x_ref, o_ref):
    # mask_ref: (1, tile_bh) float32, already scaled by 1/(1-p).
    # x_ref / o_ref: (tile_t, tile_bh) tiles of the (T, B*H) slab.
    # Compute in float32, cast once at the end (no bf16 scale bias).
    o_ref[...] = (x_ref[...].astype(jnp.float32) * mask_ref[...]).astype(o_ref.dtype)


def _round_up(v: int, m: int) -> int:
    return ((v + m - 1) // m) * m


def _sublane_multiple(dtype) -> int:
    # Sub-32-bit dtypes pack along sublanes: f32 -> 8 rows/vreg, bf16 -> 16,
    # int8/fp8 -> 32.  Rounding tile rows to this keeps vregs fully packed.
    itemsize = jnp.dtype(dtype).itemsize
    return 8 * max(1, 4 // max(1, itemsize))


def _choose_tiles(T: int, BH: int, dtype,
                  target_bytes: int = 2 << 20,
                  min_split_bytes: int = 256 << 10):
    """Pick (tile_t, tile_bh) for the (T, BH) slab.

    ~2 MiB tiles: near the measured HBM roofline on v6e, small enough that
    2x(in+out) double buffers stay well under every generation's scoped VMEM
    limit, and big enough that the ~0.35 us per-grid-step overhead is noise
    even at v7x's 3.2 TB/s.
    """
    itemsize = jnp.dtype(dtype).itemsize
    sub = _sublane_multiple(dtype)
    target_elems = max(1, target_bytes // itemsize)

    if T * BH * itemsize <= target_bytes:
        # Whole array fits in one target-sized block.
        tile_t, tile_bh = T, BH
    elif BH * min(T, sub) * itemsize <= target_bytes:
        # Normal LM shapes: tile only T, keep full-width (lane-dense) rows.
        tile_bh = BH
        tile_t = (target_elems // BH // sub) * sub
        tile_t = max(sub, min(tile_t, T))
    else:
        # Decode-like shapes (tiny T, huge BH): tile the lane axis too.
        tile_t = min(T, sub)
        per_row = max(1, target_elems // max(1, tile_t))
        tile_bh = min(BH, max(128, (per_row // 128) * 128))

    # Guarantee >=2 grid steps for arrays big enough to benefit, so the DMA
    # pipeline actually overlaps and the second TensorCore on v7x gets work.
    n_steps = pl.cdiv(T, tile_t) * pl.cdiv(BH, tile_bh)
    if n_steps < 2 and T * BH * itemsize >= min_split_bytes:
        if T >= 2 * sub:
            tile_t = min(tile_t, _round_up((T + 1) // 2, sub))
        elif BH >= 2 * 128:
            tile_bh = min(tile_bh, _round_up((BH + 1) // 2, 128))
    return tile_t, tile_bh


def locked_dropout(x, key, dropout: float = 0.5, training: bool = True,
                   donate_x: bool = False):
    """LockedDropout forward.

    x:        (T, B, H) array (seq, batch, hidden).
    key:      jax.random PRNG key; split a fresh key per forward pass to get
              a new locked mask each call (matches PyTorch semantics).
    dropout:  drop probability (static Python float).
    training: if False (or dropout == 0), returns x unchanged (eval path).
    donate_x: alias the output onto x's buffer (use when the caller no longer
              needs x); avoids the extra T*B*H HBM allocation.
    """
    if not training or dropout == 0.0:
        return x

    T, B, H = x.shape
    BH = B * H
    x2 = x.reshape(T, BH)  # lane-dense layout: last dim = B*H

    # Sample the locked mask once (shape (1, B*H)), scaled by 1/(1-p), in f32.
    keep_prob = 1.0 - float(dropout)
    keep = jax.random.bernoulli(key, p=keep_prob, shape=(1, BH))
    mask = keep.astype(jnp.float32) * jnp.float32(1.0 / keep_prob)

    # Pad the lane axis to a multiple of 128 so every store is a full,
    # unmasked vst (cheap for small BH; 128-aligned production shapes take
    # the no-pad path and add no extra HBM traffic).
    pad = (-BH) % 128
    if pad:
        x2 = jnp.pad(x2, ((0, 0), (0, pad)))
        mask = jnp.pad(mask, ((0, 0), (0, pad)))
    BHp = BH + pad

    tile_t, tile_bh = _choose_tiles(T, BHp, x.dtype)
    grid = (pl.cdiv(T, tile_t), pl.cdiv(BHp, tile_bh))

    # Explicit scoped-VMEM budget: double-buffered in + out tiles + mask tile.
    itemsize = jnp.dtype(x.dtype).itemsize
    tile_bytes = tile_t * tile_bh * itemsize
    vmem_limit = int(min(32 << 20,
                         max(4 << 20, 2 * (2 * tile_bytes + tile_bh * 4) + (1 << 20))))

    # Alias x2 -> y2 when the caller donates x, or when we padded (the padded
    # slab is a temporary, so aliasing it is always free).
    io_alias = {1: 0} if (donate_x or pad) else {}

    y2 = pl.pallas_call(
        _locked_dropout_kernel,
        out_shape=jax.ShapeDtypeStruct((T, BHp), x.dtype),
        grid=grid,
        in_specs=[
            pl.BlockSpec((1, tile_bh), lambda i, j: (0, j)),        # shared mask tile
            pl.BlockSpec((tile_t, tile_bh), lambda i, j: (i, j)),   # x tile
        ],
        out_specs=pl.BlockSpec((tile_t, tile_bh), lambda i, j: (i, j)),
        compiler_params=pltpu.CompilerParams(
            dimension_semantics=("parallel", "parallel"),  # all tiles independent
            vmem_limit_bytes=vmem_limit,
        ),
        input_output_aliases=io_alias,
    )(mask, x2)

    if pad:
        y2 = y2[:, :BH]
    return y2.reshape(T, B, H)


if __name__ == "__main__":
    root = jax.random.PRNGKey(0)
    kx, km1, km2, km3 = jax.random.split(root, 4)
    p = 0.5
    scale = 1.0 / (1.0 - p)

    # --- Test 1: small LM-like shape (T=8, B=2, H=128), 128-aligned lanes.
    T, B, H = 8, 2, 128
    x = jax.random.normal(kx, (T, B, H), dtype=jnp.float32)
    y = jax.block_until_ready(locked_dropout(x, km1, dropout=p, training=True))
    assert y.shape == x.shape and y.dtype == x.dtype
    ratio = y / jnp.where(x == 0.0, 1.0, x)
    r0 = ratio[0]
    assert bool(jnp.all(jnp.abs(ratio - r0[None]) < 1e-5)), "mask not locked over T"
    kept = jnp.abs(r0 - scale) < 1e-5
    dropped = jnp.abs(r0) < 1e-5
    assert bool(jnp.all(kept | dropped)), "mask values not in {0, 1/(1-p)}"
    assert bool(jnp.any(kept)) and bool(jnp.any(dropped)), "degenerate mask"
    # Eval path is identity.
    assert bool(jnp.all(locked_dropout(x, km1, dropout=p, training=False) == x))

    # --- Test 2: non-128-aligned hidden (H=100) exercises the pad/slice path.
    T2, B2, H2 = 8, 2, 100
    xb = jax.random.normal(kx, (T2, B2, H2), dtype=jnp.float32)
    yb = jax.block_until_ready(locked_dropout(xb, km2, dropout=p, training=True))
    ratiob = yb / jnp.where(xb == 0.0, 1.0, xb)
    assert bool(jnp.all(jnp.abs(ratiob - ratiob[0][None]) < 1e-5))
    rb = ratiob[0]
    assert bool(jnp.all((jnp.abs(rb - scale) < 1e-5) | (jnp.abs(rb) < 1e-5)))

    # --- Test 3: larger slab (512 KiB) exercises the multi-step pipelined grid.
    T3, B3, H3 = 64, 8, 256
    xc = jax.random.normal(kx, (T3, B3, H3), dtype=jnp.float32)
    yc = jax.block_until_ready(locked_dropout(xc, km3, dropout=p, training=True))
    ratioc = yc / jnp.where(xc == 0.0, 1.0, xc)
    assert bool(jnp.all(jnp.abs(ratioc - ratioc[0][None]) < 1e-5))

    print("KERNEL_OK")
</pallas_src>

<mosaic_0001>
module attributes {stable_mosaic.version = 11 : i64} {
  func.func @_locked_dropout_kernel(%arg0: i32, %arg1: i32, %arg2: memref<1x256xf32, #tpu.memory_space<vmem>>, %arg3: memref<8x256xf32, #tpu.memory_space<vmem>>, %arg4: memref<8x256xf32, #tpu.memory_space<vmem>>) attributes {dimension_semantics = [#tpu.dimension_semantics<parallel>, #tpu.dimension_semantics<parallel>], iteration_bounds = array<i64: 1, 1>, scalar_prefetch = 0 : i64, scratch_operands = 0 : i64, tpu.core_type = #tpu.core_type<tc>, window_params = [{transform_indices = @transform_0, window_bounds = array<i64: 1, 256>}, {transform_indices = @transform_1, window_bounds = array<i64: 8, 256>}, {transform_indices = @transform_2, window_bounds = array<i64: 8, 256>}]} {
    %c0 = arith.constant 0 : index
    %c0_0 = arith.constant 0 : index
    %0 = vector.load %arg3[%c0, %c0_0] : memref<8x256xf32, #tpu.memory_space<vmem>>, vector<8x256xf32>
    %c0_1 = arith.constant 0 : index
    %c0_2 = arith.constant 0 : index
    %1 = vector.load %arg2[%c0_1, %c0_2] : memref<1x256xf32, #tpu.memory_space<vmem>>, vector<1x256xf32>
    %2 = vector.broadcast %1 : vector<1x256xf32> to vector<8x256xf32>
    %3 = arith.mulf %0, %2 : vector<8x256xf32>
    %c0_3 = arith.constant 0 : index
    %c0_4 = arith.constant 0 : index
    %4 = vector.load %arg4[%c0_3, %c0_4] : memref<8x256xf32, #tpu.memory_space<vmem>>, vector<8x256xf32>
    tpu.vector_store %arg4[%c0_3, %c0_4], %3 {strides = array<i32>} : memref<8x256xf32, #tpu.memory_space<vmem>>, vector<8x256xf32>,
    return
  }
  func.func @transform_0(%arg0: i32, %arg1: i32) -> (i32, i32) {
    %c0_i32 = arith.constant 0 : i32
    %c0_i32_0 = arith.constant 0 : i32
    return %c0_i32, %arg1 : i32, i32
  }
  func.func @transform_1(%arg0: i32, %arg1: i32) -> (i32, i32) {
    %c0_i32 = arith.constant 0 : i32
    return %arg0, %arg1 : i32, i32
  }
  func.func @transform_2(%arg0: i32, %arg1: i32) -> (i32, i32) {
    %c0_i32 = arith.constant 0 : i32
    return %arg0, %arg1 : i32, i32
  }
}

</mosaic_0001>

<llo_original>
// kernel: tpu_custom_call.1
$region0: #{tpu_custom_call.1}
  #allocation0 [shape = 'u32[]', space=smem, size = 0x4, offset = 0x4, fixed_abs, tag = 'smem constant byte address 0x4 - core index']
  #allocation1 [shape = 'u32[72,128]{1,0:T(1,128)}', space=vmem, size = 0x9000, scoped, tag = 'internal scratch']
  %s0 = inlined_call_operand.hbm [shape: f32[1,256], index: 0, kind: input, shape index: {}]
  %s1 = inlined_call_operand.hbm [shape: f32[8,256], index: 1, kind: input, shape index: {}]
  %s2 = inlined_call_operand.hbm [shape: f32[8,256], index: 2, kind: output, shape index: {}]
  %s3 = sld [smem:[#allocation0]]
  $region26: #{tpu_custom_call.1} parent=0
    _
  %s5 = ssub.s32 1, %s3
  %s6 = scalar_select 0, %s5, %s3
  $region1: #{tpu_custom_call.1} parent=0
    #allocation2 [shape = 'u8[1024]{0}', space=vmem, size = 0x400, scoped, tag = 'input window, operand 0, single buffered']
    #allocation3 [shape = 's32[1]{0}', space=sflag, size = 0x4, scoped, tag = 'scoped memory for tpu_custom_call.1']
    #allocation4 [shape = 's32[1]{0}', space=sflag, size = 0x4, scoped, tag = 'scoped memory for tpu_custom_call.1']
    #allocation5 [shape = 'u8[8192]{0}', space=vmem, size = 0x2000, scoped, tag = 'input window, operand 1, single buffered']
    #allocation6 [shape = 's32[1]{0}', space=sflag, size = 0x4, scoped, tag = 'scoped memory for tpu_custom_call.1']
    #allocation7 [shape = 'u8[8192]{0}', space=vmem, size = 0x2000, scoped, tag = 'output window, operand 0, single buffered']
    %7 = vsyncpa [#allocation3], 0
    %8 = vsyncpa [#allocation6], 0
    %9 = vsyncpa [#allocation4], 0
    // Predicated region
    $region2: #{tpu_custom_call.1} parent=1 // pred_check
      _
    $region3: #{tpu_custom_call.1} parent=1 // pred_check_branch
      %11 = sbr.rel (0) target = $region5
    $region4: #{tpu_custom_call.1} parent=1 // pred_region
      %13 = vsyncadd [#allocation3], 0
      %s15 = sshll.u32 %s0, 4
      %s16 = int_to_ptr.hbm [resolvable:$true] %s15
      %s17 = sshll.u32 [#allocation2], 4
      %s18 = int_to_ptr.vmem [resolvable:$true] %s17
      %20 = dma.hbm_to_vmem [thread:$0]  %s16, 32, %s18, [#allocation3]
    $region5: #{tpu_custom_call.1} parent=1 // pred_fallthru
      _
    // Predicated region
    $region6: #{tpu_custom_call.1} parent=1 // pred_check
      _
    $region7: #{tpu_custom_call.1} parent=1 // pred_check_branch
      %22 = sbr.rel (0) target = $region9
    $region8: #{tpu_custom_call.1} parent=1 // pred_region
      %24 = vsyncadd [#allocation6], 0
      %s26 = sshll.u32 %s1, 4
      %s27 = int_to_ptr.hbm [resolvable:$true] %s26
      %s28 = sshll.u32 [#allocation5], 4
      %s29 = int_to_ptr.vmem [resolvable:$true] %s28
      %31 = dma.hbm_to_vmem [thread:$0]  %s27, 256, %s29, [#allocation6]
    $region9: #{tpu_custom_call.1} parent=1 // pred_fallthru
      _
    // Predicated region
    $region10: #{tpu_custom_call.1} parent=1 // pred_check
      _
    $region11: #{tpu_custom_call.1} parent=1 // pred_check_branch
      %33 = sbr.rel (0) target = $region13
    $region12: #{tpu_custom_call.1} parent=1 // pred_region
      %35 = dma.done [#allocation3], 32
    $region13: #{tpu_custom_call.1} parent=1 // pred_fallthru
      _
    // Predicated region
    $region14: #{tpu_custom_call.1} parent=1 // pred_check
      _
    $region15: #{tpu_custom_call.1} parent=1 // pred_check_branch
      %37 = sbr.rel (0) target = $region17
    $region16: #{tpu_custom_call.1} parent=1 // pred_region
      %39 = dma.done [#allocation6], 256
    $region17: #{tpu_custom_call.1} parent=1 // pred_fallthru
      _
    %v40 = vld [vmem:[#allocation5] sm:$0xff]
    %v41 = vld [vmem:[#allocation5 + $0x8] sm:$0xff]
    %v42 = vld [vmem:[#allocation2] sm:$0x3]
    %v44 = vperm.slane %v42, 0
    %v45 = vperm.slane %v42, 1
    %v48 = vmul.f32 %v40, %v44
    %v49 = vmul.f32 %v41, %v45
    %50 = vst [vmem:[#allocation7] sm:$0xff] %v48
    %51 = vst [vmem:[#allocation7 + $0x8] sm:$0xff] %v49
    // Predicated region
    $region18: #{tpu_custom_call.1} parent=1 // pred_check
      _
    $region19: #{tpu_custom_call.1} parent=1 // pred_check_branch
      %53 = sbr.rel (0) target = $region21
    $region20: #{tpu_custom_call.1} parent=1 // pred_region
      %55 = vsyncadd [#allocation4], 0
      %s57 = sshll.u32 [#allocation7], 4
      %s58 = int_to_ptr.vmem [resolvable:$true] %s57
      %s59 = sshll.u32 %s2, 4
      %s60 = int_to_ptr.hbm [resolvable:$true] %s59
      %62 = dma.vmem_to_hbm [thread:$0]  %s58, 256, %s60, [#allocation4]
    $region21: #{tpu_custom_call.1} parent=1 // pred_fallthru
      _
    // Predicated region
    $region22: #{tpu_custom_call.1} parent=1 // pred_check
      _
    $region23: #{tpu_custom_call.1} parent=1 // pred_check_branch
      %64 = sbr.rel (0) target = $region25
    $region24: #{tpu_custom_call.1} parent=1 // pred_region
      %66 = dma.done [#allocation4], 256
    $region25: #{tpu_custom_call.1} parent=1 // pred_fallthru
      _
    %67 = vsyncpa [#allocation3], 1
    %68 = vsyncpa [#allocation6], 1
    %69 = vsyncpa [#allocation4], 1

</llo_original>
